<compile_context>
chip_gen: v6e
topology: v6e:2x2x1
jax: 0.10.0
libtpu: 0.0.40
codegen_flags: <defaults>
</compile_context>

<pallas_src>
import functools

import jax
import jax.numpy as jnp
from jax.experimental import pallas as pl
from jax.experimental.pallas import tpu as pltpu


def _ce_kernel(logits_ref, targets_ref, out_ref, m_sc, l_sc, t_sc, *,
               n_total, c_total, tn, tc, mask_cols):
    """Grid = (row tiles, class tiles). Online LSE over class tiles per row tile."""
    i = pl.program_id(0)          # row-tile index ("parallel")
    j = pl.program_id(1)          # class-tile index ("arbitrary" reduction)
    nc = pl.num_programs(1)

    @pl.when(j == 0)
    def _():
        m_sc[...] = jnp.full_like(m_sc, -jnp.inf)
        l_sc[...] = jnp.zeros_like(l_sc)
        t_sc[...] = jnp.zeros_like(t_sc)

    x = logits_ref[...].astype(jnp.float32)            # (TN, TC)
    tgt = targets_ref[...]                             # (TN, 1) int32

    # Global class ids of this tile's columns.
    col_ids = jax.lax.broadcasted_iota(jnp.int32, x.shape, 1) + j * tc
    # Mask class padding (only possible on a partial last class tile).
    xm = jnp.where(col_ids < c_total, x, -1e30) if mask_cols else x

    # Online (flash-style) log-sum-exp across class tiles.
    m_prev = m_sc[...]                                  # (TN, 1)
    m_new = jnp.maximum(m_prev, jnp.max(xm, axis=-1, keepdims=True))
    alpha = jnp.exp(m_prev - m_new)                     # 0 on first tile (m_prev = -inf)
    l_sc[...] = alpha * l_sc[...] + jnp.sum(jnp.exp(xm - m_new),
                                            axis=-1, keepdims=True)
    m_sc[...] = m_new

    # Accumulate the (unshifted) target logit; each valid target hits exactly
    # one class tile, so a masked sum doubles as the gather.
    t_sc[...] = t_sc[...] + jnp.sum(
        jnp.where(col_ids == tgt, x, 0.0), axis=-1, keepdims=True)

    @pl.when(j == nc - 1)
    def _():
        per_row = m_sc[...] + jnp.log(l_sc[...]) - t_sc[...]        # (TN, 1)
        # Drop rows past the true batch size. A partial last row tile reads
        # undefined data; jnp.where keeps any NaN/Inf there from propagating.
        row_ids = jax.lax.broadcasted_iota(jnp.int32, per_row.shape, 0) + i * tn
        per_row = jnp.where(row_ids < n_total, per_row, 0.0)
        # Lane-dense partial-sum block; wrapper reads [tile, 0, 0].
        out_ref[...] = jnp.broadcast_to(jnp.sum(per_row), out_ref.shape)


def ce_loss_ack(ack, similarity, *, tn=None, tc=None):
    """ack: float logits [N, C]; similarity: int class indices [N]. Returns scalar mean CE."""
    n, c = ack.shape

    # ---- class-axis tile ----
    if tc is None:
        tc = 2048
    if tc >= c:
        tc = c                                   # full extent: no 128-alignment required
    else:
        tc = max(128, (tc // 128) * 128)         # lane-aligned class tiles

    # ---- batch-axis tile (double-buffered logits stream sized for v7x's
    #      smaller scoped VMEM; bigger tiles picked automatically when C small) ----
    itemsize = jnp.dtype(ack.dtype).itemsize
    budget_bytes = 8 * 1024 * 1024
    tn_budget = max(8, budget_bytes // (2 * tc * itemsize))
    if tn is None:
        tn = min(1024, tn_budget)
    if tn >= n:
        tn = n                                   # full extent: no 8-alignment required
    else:
        tn = max(8, (tn // 8) * 8)               # sublane-aligned row tiles

    nr = pl.cdiv(n, tn)
    nc = pl.cdiv(c, tc)
    mask_cols = (tc < c) and (c % tc != 0)

    tgt = similarity.astype(jnp.int32).reshape(n, 1)

    kernel = functools.partial(_ce_kernel, n_total=n, c_total=c,
                               tn=tn, tc=tc, mask_cols=mask_cols)

    partials = pl.pallas_call(
        kernel,
        out_shape=jax.ShapeDtypeStruct((nr, 8, 128), jnp.float32),
        grid=(nr, nc),
        in_specs=[
            pl.BlockSpec((tn, tc), lambda i, j: (i, j)),
            pl.BlockSpec((tn, 1), lambda i, j: (i, 0)),
        ],
        out_specs=pl.BlockSpec((1, 8, 128), lambda i, j: (i, 0, 0)),
        scratch_shapes=[
            pltpu.VMEM((tn, 1), jnp.float32),    # running max m
            pltpu.VMEM((tn, 1), jnp.float32),    # running sum l
            pltpu.VMEM((tn, 1), jnp.float32),    # target logit
        ],
        compiler_params=pltpu.CompilerParams(
            dimension_semantics=("parallel", "arbitrary"),
        ),
    )(ack, tgt)

    # Tiny wrapper-side reduction: sum of per-tile partial sums / true batch size.
    return jnp.sum(partials[:, 0, 0]) / n


if __name__ == "__main__":
    key = jax.random.PRNGKey(0)
    k_logits, k_targets = jax.random.split(key)

    def ref_ce(logits, labels):
        lp = jax.nn.log_softmax(logits.astype(jnp.float32), axis=-1)
        return -jnp.mean(lp[jnp.arange(logits.shape[0]), labels])

    # Small shapes consistent with the module's forward.
    N, C = 8, 32
    ack = jax.random.normal(k_logits, (N, C), dtype=jnp.float32)
    similarity = jax.random.randint(k_targets, (N,), 0, C, dtype=jnp.int32)
    loss = ce_loss_ack(ack, similarity)
    jax.block_until_ready(loss)
    assert jnp.allclose(loss, ref_ce(ack, similarity), atol=1e-5, rtol=1e-5), (
        loss, ref_ce(ack, similarity))

    # Ragged batch + non-128-aligned classes (masked partial tiles, no HBM pad copies).
    N2, C2 = 300, 200
    ack2 = jax.random.normal(k_logits, (N2, C2), dtype=jnp.float32)
    sim2 = jax.random.randint(k_targets, (N2,), 0, C2, dtype=jnp.int32)
    loss2 = ce_loss_ack(ack2, sim2, tn=128)
    jax.block_until_ready(loss2)
    assert jnp.allclose(loss2, ref_ce(ack2, sim2), atol=1e-5, rtol=1e-5), (
        loss2, ref_ce(ack2, sim2))

    # Class-tiled (online log-sum-exp) path with a partial last class tile.
    N3, C3 = 64, 1000
    ack3 = jax.random.normal(k_logits, (N3, C3), dtype=jnp.float32)
    sim3 = jax.random.randint(k_targets, (N3,), 0, C3, dtype=jnp.int32)
    loss3 = ce_loss_ack(ack3, sim3, tn=32, tc=256)
    jax.block_until_ready(loss3)
    assert jnp.allclose(loss3, ref_ce(ack3, sim3), atol=1e-4, rtol=1e-4), (
        loss3, ref_ce(ack3, sim3))

    print("KERNEL_OK")
</pallas_src>

<mosaic_0001>
module attributes {stable_mosaic.version = 11 : i64} {
  func.func @_ce_kernel(%arg0: i32, %arg1: i32, %arg2: memref<8x32xf32, #tpu.memory_space<vmem>>, %arg3: memref<8x1xi32, #tpu.memory_space<vmem>>, %arg4: memref<1x8x128xf32, #tpu.memory_space<vmem>>, %arg5: memref<8x1xf32, #tpu.memory_space<vmem>>, %arg6: memref<8x1xf32, #tpu.memory_space<vmem>>, %arg7: memref<8x1xf32, #tpu.memory_space<vmem>>) attributes {dimension_semantics = [#tpu.dimension_semantics<parallel>, #tpu.dimension_semantics<arbitrary>], iteration_bounds = array<i64: 1, 1>, scalar_prefetch = 0 : i64, scratch_operands = 3 : i64, tpu.core_type = #tpu.core_type<tc>, window_params = [{transform_indices = @transform_0, window_bounds = array<i64: 8, 32>}, {transform_indices = @transform_1, window_bounds = array<i64: 8, 1>}, {transform_indices = @transform_2, window_bounds = array<i64: 1, 8, 128>}]} {
    %c0_i32 = arith.constant 0 : i32
    %0 = arith.cmpi eq, %arg1, %c0_i32 : i32
    %1 = arith.extui %0 : i1 to i32
    %c0_i32_0 = arith.constant 0 : i32
    %2 = arith.cmpi ne, %1, %c0_i32_0 : i32
    scf.if %2 {
      %cst_21 = arith.constant 0xFF800000 : f32
      %37 = vector.broadcast %cst_21 : f32 to vector<8x1xf32>
      %c0_22 = arith.constant 0 : index
      %c0_23 = arith.constant 0 : index
      %38 = vector.load %arg5[%c0_22, %c0_23] : memref<8x1xf32, #tpu.memory_space<vmem>>, vector<8x1xf32>
      tpu.vector_store %arg5[%c0_22, %c0_23], %37 {strides = array<i32>} : memref<8x1xf32, #tpu.memory_space<vmem>>, vector<8x1xf32>,
      %cst_24 = arith.constant 0.000000e+00 : f32
      %39 = vector.broadcast %cst_24 : f32 to vector<8x1xf32>
      %c0_25 = arith.constant 0 : index
      %c0_26 = arith.constant 0 : index
      %40 = vector.load %arg6[%c0_25, %c0_26] : memref<8x1xf32, #tpu.memory_space<vmem>>, vector<8x1xf32>
      tpu.vector_store %arg6[%c0_25, %c0_26], %39 {strides = array<i32>} : memref<8x1xf32, #tpu.memory_space<vmem>>, vector<8x1xf32>,
      %cst_27 = arith.constant 0.000000e+00 : f32
      %41 = vector.broadcast %cst_27 : f32 to vector<8x1xf32>
      %c0_28 = arith.constant 0 : index
      %c0_29 = arith.constant 0 : index
      %42 = vector.load %arg7[%c0_28, %c0_29] : memref<8x1xf32, #tpu.memory_space<vmem>>, vector<8x1xf32>
      tpu.vector_store %arg7[%c0_28, %c0_29], %41 {strides = array<i32>} : memref<8x1xf32, #tpu.memory_space<vmem>>, vector<8x1xf32>,
    } else {
    }
    %c0 = arith.constant 0 : index
    %c0_1 = arith.constant 0 : index
    %3 = vector.load %arg2[%c0, %c0_1] : memref<8x32xf32, #tpu.memory_space<vmem>>, vector<8x32xf32>
    %c0_2 = arith.constant 0 : index
    %c0_3 = arith.constant 0 : index
    %4 = vector.load %arg3[%c0_2, %c0_3] : memref<8x1xi32, #tpu.memory_space<vmem>>, vector<8x1xi32>
    %5 = tpu.iota {dimensions = array<i32: 1>} : vector<8x32xi32>
    %c32_i32 = arith.constant 32 : i32
    %6 = arith.muli %arg1, %c32_i32 : i32
    %7 = vector.broadcast %6 : i32 to vector<8x32xi32>
    %8 = arith.addi %5, %7 : vector<8x32xi32>
    %c0_4 = arith.constant 0 : index
    %c0_5 = arith.constant 0 : index
    %9 = vector.load %arg5[%c0_4, %c0_5] : memref<8x1xf32, #tpu.memory_space<vmem>>, vector<8x1xf32>
    %cst = arith.constant dense<0xFF800000> : vector<8xf32>
    %10 = vector.multi_reduction <maximumf>, %3, %cst [1] : vector<8x32xf32> to vector<8xf32>
    %11 = vector.shape_cast %10 : vector<8xf32> to vector<8x1xf32>
    %12 = arith.maximumf %9, %11 : vector<8x1xf32>
    %13 = arith.subf %9, %12 : vector<8x1xf32>
    %14 = math.exp %13 : vector<8x1xf32>
    %c0_6 = arith.constant 0 : index
    %c0_7 = arith.constant 0 : index
    %15 = vector.load %arg6[%c0_6, %c0_7] : memref<8x1xf32, #tpu.memory_space<vmem>>, vector<8x1xf32>
    %16 = arith.mulf %14, %15 : vector<8x1xf32>
    %17 = vector.broadcast %12 : vector<8x1xf32> to vector<8x32xf32>
    %18 = arith.subf %3, %17 : vector<8x32xf32>
    %19 = math.exp %18 : vector<8x32xf32>
    %cst_8 = arith.constant dense<0.000000e+00> : vector<8xf32>
    %20 = vector.multi_reduction <add>, %19, %cst_8 [1] : vector<8x32xf32> to vector<8xf32>
    %21 = vector.shape_cast %20 : vector<8xf32> to vector<8x1xf32>
    %22 = arith.addf %16, %21 : vector<8x1xf32>
    %c0_9 = arith.constant 0 : index
    %c0_10 = arith.constant 0 : index
    %23 = vector.load %arg6[%c0_9, %c0_10] : memref<8x1xf32, #tpu.memory_space<vmem>>, vector<8x1xf32>
    tpu.vector_store %arg6[%c0_9, %c0_10], %22 {strides = array<i32>} : memref<8x1xf32, #tpu.memory_space<vmem>>, vector<8x1xf32>,
    %c0_11 = arith.constant 0 : index
    %c0_12 = arith.constant 0 : index
    %24 = vector.load %arg5[%c0_11, %c0_12] : memref<8x1xf32, #tpu.memory_space<vmem>>, vector<8x1xf32>
    tpu.vector_store %arg5[%c0_11, %c0_12], %12 {strides = array<i32>} : memref<8x1xf32, #tpu.memory_space<vmem>>, vector<8x1xf32>,
    %c0_13 = arith.constant 0 : index
    %c0_14 = arith.constant 0 : index
    %25 = vector.load %arg7[%c0_13, %c0_14] : memref<8x1xf32, #tpu.memory_space<vmem>>, vector<8x1xf32>
    %26 = vector.broadcast %4 : vector<8x1xi32> to vector<8x32xi32>
    %27 = arith.cmpi eq, %8, %26 : vector<8x32xi32>
    %cst_15 = arith.constant 0.000000e+00 : f32
    %28 = vector.broadcast %cst_15 : f32 to vector<8x32xf32>
    %29 = arith.select %27, %3, %28 : vector<8x32xi1>, vector<8x32xf32>
    %cst_16 = arith.constant dense<0.000000e+00> : vector<8xf32>
    %30 = vector.multi_reduction <add>, %29, %cst_16 [1] : vector<8x32xf32> to vector<8xf32>
    %31 = vector.shape_cast %30 : vector<8xf32> to vector<8x1xf32>
    %32 = arith.addf %25, %31 : vector<8x1xf32>
    %c0_17 = arith.constant 0 : index
    %c0_18 = arith.constant 0 : index
    %33 = vector.load %arg7[%c0_17, %c0_18] : memref<8x1xf32, #tpu.memory_space<vmem>>, vector<8x1xf32>
    tpu.vector_store %arg7[%c0_17, %c0_18], %32 {strides = array<i32>} : memref<8x1xf32, #tpu.memory_space<vmem>>, vector<8x1xf32>,
    %c0_i32_19 = arith.constant 0 : i32
    %34 = arith.cmpi eq, %arg1, %c0_i32_19 : i32
    %35 = arith.extui %34 : i1 to i32
    %c0_i32_20 = arith.constant 0 : i32
    %36 = arith.cmpi ne, %35, %c0_i32_20 : i32
    scf.if %36 {
      %c0_21 = arith.constant 0 : index
      %c0_22 = arith.constant 0 : index
      %37 = vector.load %arg5[%c0_21, %c0_22] : memref<8x1xf32, #tpu.memory_space<vmem>>, vector<8x1xf32>
      %c0_23 = arith.constant 0 : index
      %c0_24 = arith.constant 0 : index
      %38 = vector.load %arg6[%c0_23, %c0_24] : memref<8x1xf32, #tpu.memory_space<vmem>>, vector<8x1xf32>
      %39 = math.log %38 : vector<8x1xf32>
      %40 = arith.addf %37, %39 : vector<8x1xf32>
      %c0_25 = arith.constant 0 : index
      %c0_26 = arith.constant 0 : index
      %41 = vector.load %arg7[%c0_25, %c0_26] : memref<8x1xf32, #tpu.memory_space<vmem>>, vector<8x1xf32>
      %42 = arith.subf %40, %41 : vector<8x1xf32>
      %43 = tpu.iota {dimensions = array<i32: 0>} : vector<8x1xi32>
      %c8_i32 = arith.constant 8 : i32
      %44 = arith.muli %arg0, %c8_i32 : i32
      %45 = vector.broadcast %44 : i32 to vector<8x1xi32>
      %46 = arith.addi %43, %45 : vector<8x1xi32>
      %c8_i32_27 = arith.constant 8 : i32
      %47 = vector.broadcast %c8_i32_27 : i32 to vector<8x1xi32>
      %48 = arith.cmpi slt, %46, %47 : vector<8x1xi32>
      %cst_28 = arith.constant 0.000000e+00 : f32
      %49 = vector.broadcast %cst_28 : f32 to vector<8x1xf32>
      %50 = arith.select %48, %42, %49 : vector<8x1xi1>, vector<8x1xf32>
      %51 = vector.shape_cast %50 : vector<8x1xf32> to vector<1x8x1xf32>
      %cst_29 = arith.constant dense<0.000000e+00> : vector<1xf32>
      %52 = vector.multi_reduction <add>, %51, %cst_29 [1, 2] : vector<1x8x1xf32> to vector<1xf32>
      %53 = vector.shape_cast %52 : vector<1xf32> to vector<1x1x1xf32>
      %54 = vector.extract %53[0, 0, 0] : f32 from vector<1x1x1xf32>
      %55 = vector.broadcast %54 : f32 to vector<1x8x128xf32>
      %c0_30 = arith.constant 0 : index
      %c0_31 = arith.constant 0 : index
      %c0_32 = arith.constant 0 : index
      %56 = vector.load %arg4[%c0_30, %c0_31, %c0_32] : memref<1x8x128xf32, #tpu.memory_space<vmem>>, vector<1x8x128xf32>
      tpu.vector_store %arg4[%c0_30, %c0_31, %c0_32], %55 {strides = array<i32>} : memref<1x8x128xf32, #tpu.memory_space<vmem>>, vector<1x8x128xf32>,
    } else {
    }
    return
  }
  func.func @transform_0(%arg0: i32, %arg1: i32) -> (i32, i32) {
    %c0_i32 = arith.constant 0 : i32
    return %arg0, %arg1 : i32, i32
  }
  func.func @transform_1(%arg0: i32, %arg1: i32) -> (i32, i32) {
    %c0_i32 = arith.constant 0 : i32
    %c0_i32_0 = arith.constant 0 : i32
    return %arg0, %c0_i32 : i32, i32
  }
  func.func @transform_2(%arg0: i32, %arg1: i32) -> (i32, i32, i32) {
    %c0_i32 = arith.constant 0 : i32
    %c0_i32_0 = arith.constant 0 : i32
    %c0_i32_1 = arith.constant 0 : i32
    return %arg0, %c0_i32, %c0_i32_0 : i32, i32, i32
  }
}

</mosaic_0001>

<llo_original>
// kernel: tpu_custom_call.1
$region0: #{tpu_custom_call.1}
  #allocation0 [shape = 'u32[]', space=smem, size = 0x4, offset = 0x4, fixed_abs, tag = 'smem constant byte address 0x4 - core index']
  #allocation1 [shape = 'u32[144,128]{1,0:T(1,128)}', space=vmem, size = 0x12000, scoped, tag = 'internal scratch']
  #allocation2 [shape = 'f32[8,1]{1,0:T(8,128)}', space=vmem, size = 0x1000, scoped, tag = 'scratch operand']
  #allocation3 [shape = 'f32[8,1]{1,0:T(8,128)}', space=vmem, size = 0x1000, scoped, tag = 'scratch operand']
  #allocation4 [shape = 'f32[8,1]{1,0:T(8,128)}', space=vmem, size = 0x1000, scoped, tag = 'scratch operand']
  %s0 = inlined_call_operand.vmem [shape: f32[8,32], index: 0, kind: input, shape index: {}]
  %s1 = inlined_call_operand.vmem [shape: s32[8,1], index: 1, kind: input, shape index: {}]
  %s2 = inlined_call_operand.hbm [shape: f32[1,8,128], index: 2, kind: output, shape index: {}]
  %s3 = sld [smem:[#allocation0]]
  $region26: #{tpu_custom_call.1} parent=0
    _
  %s5 = ssub.s32 1, %s3
  %s6 = scalar_select 0, %s5, %s3
  $region1: #{tpu_custom_call.1} parent=0
    #allocation5 [shape = 'u8[4096]{0}', space=vmem, size = 0x1000, scoped, tag = 'output window, operand 0, single buffered']
    #allocation6 [shape = 's32[1]{0}', space=sflag, size = 0x4, scoped, tag = 'scoped memory for tpu_custom_call.1']
    %7 = vsyncpa [#allocation6], 0
    // Predicated region
    $region2: #{tpu_custom_call.1} parent=1 // pred_check
      _
    $region3: #{tpu_custom_call.1} parent=1 // pred_check_branch
      %9 = sbr.rel (0) target = $region5
    $region4: #{tpu_custom_call.1} parent=1 // pred_region
      _
    $region5: #{tpu_custom_call.1} parent=1 // pred_fallthru
      _
    // Predicated region
    $region6: #{tpu_custom_call.1} parent=1 // pred_check
      _
    $region7: #{tpu_custom_call.1} parent=1 // pred_check_branch
      %11 = sbr.rel (0) target = $region9
    $region8: #{tpu_custom_call.1} parent=1 // pred_region
      _
    $region9: #{tpu_custom_call.1} parent=1 // pred_fallthru
      _
    %p12 = scmp.eq.s32.totalorder 0, 0
    // Predicated region
    $region10: #{tpu_custom_call.1} parent=1 // pred_check
      %p13 = pneg %p12
    $region11: #{tpu_custom_call.1} parent=1 // pred_check_branch
      %15 = sbr.rel (%p13) target = $region13
    $region12: #{tpu_custom_call.1} parent=1 // pred_region
      %vm16 = vcmask 7168
      %17 = vst.msk [vmem:[#allocation2] sm:$0xff] %vm16, -inf
      %18 = vst.msk [vmem:[#allocation3] sm:$0xff] %vm16, 0.0
      %19 = vst.msk [vmem:[#allocation4] sm:$0xff] %vm16, 0.0
    $region13: #{tpu_custom_call.1} parent=1 // pred_fallthru
      _
    %v20 = vld [vmem:[%s0] sm:$0xff]
    %v21 = vld [vmem:[%s1] sm:$0xff]
    %v22 = vlaneseq
    %v23 = vand.u32 %v22, 127
    %s24 = smul.u32 0, 32
    %v25 = vstv %s24
    %v26 = vadd.s32 %v23, %v25
    %v27 = vld [vmem:[#allocation2] sm:$0xff]
    %vm28 = vcmask 261120
    %v29 = vsel %vm28, %v20, -inf
    %30 = vmax.xlane.f32.xlu0 %v29
    %v31 = vpop.xlane.xlu0 %30
    %v32 = vmax.f32 %v27, %v31
    %v33 = vsub.f32 %v27, %v32
    %v34 = vmul.f32 %v33, 1.442695
    %v35 = vpow.pop %v34
    %v36 = vld [vmem:[#allocation3] sm:$0xff]
    %v37 = vmul.f32 %v35, %v36
    %39 = vset.pattern.permute.xlu0 0
    %40 = vperm.xlu0 %39, %v32
    %v41 = vpop.permute.xlu0 %40
    %v43 = vsub.f32 %v20, %v41
    %v44 = vmul.f32 %v43, 1.442695
    %v45 = vpow.pop %v44
    %v46 = vsel %vm28, %v45, 0.0
    %47 = vadd.xlane.f32.xlu0 %v46
    %v48 = vpop.xlane.xlu0 %47
    %v49 = vadd.f32 %v37, %v48
    %vm50 = vcmask 7168
    %51 = vst.msk [vmem:[#allocation3] sm:$0xff] %vm50, %v49
    %52 = vst.msk [vmem:[#allocation2] sm:$0xff] %vm50, %v32
    %v53 = vld [vmem:[#allocation4] sm:$0xff]
    %54 = vset.pattern.permute.xlu0 0
    %55 = vperm.xlu0 %54, %v21
    %v56 = vpop.permute.xlu0 %55
    %vm57 = vcmp.eq.s32.totalorder %v26, %v56
    %v58 = vsel %vm57, %v20, 0.0
    %v59 = vsel %vm28, %v58, 0.0
    %60 = vadd.xlane.f32.xlu0 %v59
    %v61 = vpop.xlane.xlu0 %60
    %v62 = vadd.f32 %v53, %v61
    %63 = vst.msk [vmem:[#allocation4] sm:$0xff] %vm50, %v62
    // Predicated region
    $region14: #{tpu_custom_call.1} parent=1 // pred_check
      %p64 = pneg %p12
    $region15: #{tpu_custom_call.1} parent=1 // pred_check_branch
      %66 = sbr.rel (%p64) target = $region17
    $region16: #{tpu_custom_call.1} parent=1 // pred_region
      %v67 = vld [vmem:[#allocation2] sm:$0xff]
      %v68 = vld [vmem:[#allocation3] sm:$0xff]
      %v69 = vlog2.pop %v68
      %v70 = vmul.f32 %v69, 0.6931472
      %v71 = vadd.f32 %v67, %v70
      %v72 = vld [vmem:[#allocation4] sm:$0xff]
      %v73 = vsub.f32 %v71, %v72
      %v74 = vlaneseq
      %v75 = vshrl.u32 %v74, 7
      %s76 = smul.u32 0, 8
      %v77 = vstv %s76
      %v78 = vadd.s32 %v75, %v77
      %vm79 = vcmp.lt.s32.totalorder %v78, 8
      %v80 = vsel %vm79, %v73, 0.0
      %v81 = vsel %vm50, %v80, 0.0
      %82 = vadd.xlane.f32.xlu0 %v81
      %v83 = vpop.xlane.xlu0 %82
      %v84 = vrot.slane %v83, 4
      %v85 = vadd.f32 %v83, %v84
      %v86 = vrot.slane %v85, 2
      %v87 = vadd.f32 %v85, %v86
      %v88 = vrot.slane %v87, 1
      %v89 = vadd.f32 %v87, %v88
      %s90 = vtos %v89
      %v91 = vstv %s90
      %92 = vst [vmem:[#allocation5] sm:$0xff] %v91
    $region17: #{tpu_custom_call.1} parent=1 // pred_fallthru
      _
    // Predicated region
    $region18: #{tpu_custom_call.1} parent=1 // pred_check
      _
    $region19: #{tpu_custom_call.1} parent=1 // pred_check_branch
      %94 = sbr.rel (0) target = $region21
    $region20: #{tpu_custom_call.1} parent=1 // pred_region
      %s96 = ssub.s32 128, 128
      %97 = vsyncadd [#allocation6], %s96
      %s99 = sshll.u32 [#allocation5], 4
      %s100 = int_to_ptr.vmem [resolvable:$true] %s99
      %102 = dma.vmem_to_hbm [thread:$0]  %s100, 128, %s2, [#allocation6]
    $region21: #{tpu_custom_call.1} parent=1 // pred_fallthru
      _
    // Predicated region
    $region22: #{tpu_custom_call.1} parent=1 // pred_check
      _
    $region23: #{tpu_custom_call.1} parent=1 // pred_check_branch
      %104 = sbr.rel (0) target = $region25
    $region24: #{tpu_custom_call.1} parent=1 // pred_region
      %105 = dma.done [#allocation6], 128
    $region25: #{tpu_custom_call.1} parent=1 // pred_fallthru
      _
    %106 = vsyncpa [#allocation6], 1

</llo_original>
